<compile_context>
chip_gen: v5e
topology: v5e:2x2
jax: 0.10.0
libtpu: 0.0.40
codegen_flags: <defaults>
</compile_context>

<pallas_src>
import functools

import jax
import jax.numpy as jnp
import numpy as np
from jax import lax
from jax.experimental import pallas as pl
from jax.experimental.pallas import tpu as pltpu


def _ipnn_fused_kernel(x_ref, w_ref, o_ref, stats_ref, *, batch, tile):
    # x_ref    : [TB, NM]        flat input tile (f32 or bf16)
    # w_ref    : [2*NM, O]       merged folded weight (resident: constant index map)
    # o_ref    : [TB, O]         un-normalized affine output (unpadded last dim)
    # stats_ref: [1, 2, O]       per-tile BN partials: row 0 = sum, row 1 = sum of squares
    x = x_ref[...]
    xx = jnp.concatenate([x, x * x], axis=-1)                   # (TB, 2*NM)
    acc = jnp.dot(xx, w_ref[...], preferred_element_type=jnp.float32)  # (TB, O) f32
    o_ref[...] = acc.astype(o_ref.dtype)

    # Masked per-tile BN statistics (rows past the real batch are excluded;
    # jnp.where keeps possible NaN garbage in the overhanging rows out of the sums).
    row = lax.broadcasted_iota(jnp.int32, acc.shape, 0) + pl.program_id(0) * tile
    valid = row < batch
    av = jnp.where(valid, acc, 0.0)
    s = jnp.sum(av, axis=0, keepdims=True)                       # (1, O)
    ss = jnp.sum(av * av, axis=0, keepdims=True)                 # (1, O)
    stats_ref[...] = jnp.concatenate([s, ss], axis=0)[None]      # (1, 2, O)


def _pick_batch_tile(B, NM, O, x_itemsize, w_itemsize, batch_tile, budget_bytes):
    """Largest batch tile that fits the VMEM budget, mult-of-8, >=2 grid steps."""
    resident = 2 * (2 * NM) * O * w_itemsize          # merged weight (double-buffered)
    per_row = (2 * NM * x_itemsize                    # x block, double-buffered
               + 2 * O * 4                            # f32 out block, double-buffered
               + 2 * NM * x_itemsize                  # in-kernel concat temp
               + O * 4)                               # f32 accumulator temp
    avail = max(budget_bytes - resident - 8192, per_row * 8)
    tb = int(avail // per_row)
    tb = min(tb, batch_tile, B)
    if B < 8:
        return B                                      # block == full dim
    tb = max(8, (tb // 8) * 8)
    if B >= 16:
        # keep at least two grid steps so the "parallel" batch axis can shard
        # across both TensorCores on v7x (no-op cost on v5e/v6e).
        half = (((B + 1) // 2) + 7) // 8 * 8
        tb = min(tb, half)
    return max(8, tb)


def inner_product_forward(x, W_z, theta, W_aff, b_aff, *, num_fields, embedding_dim,
                          eps=1e-5, use_bn=True, batch_tile=512,
                          compute_dtype=None, vmem_budget_bytes=None):
    """Forward of the InnerProduct block (training-mode BN, dropout p=0)."""
    B = x.shape[0]
    N, M = num_fields, embedding_dim
    NM = N * M
    O = W_aff.shape[0]
    f32 = jnp.float32
    cdt = jnp.dtype(compute_dtype) if compute_dtype is not None else jnp.dtype(x.dtype)

    # ---- one-time weight folding (batch-independent, fused by XLA) ----------
    Wc_z = jnp.dot(W_aff[:, :N].astype(f32), W_z.reshape(N, NM).astype(f32))    # [O, NM]
    th2 = jnp.square(theta.astype(f32))                                         # [D2, N]
    Wc_p = jnp.repeat(jnp.dot(W_aff[:, N:].astype(f32), th2), M, axis=1)        # [O, NM]
    # merged folded weight -> one resident VMEM buffer, one MXU matmul per tile
    w_fold = jnp.concatenate([Wc_z, Wc_p], axis=1).T.astype(cdt)                # [2*NM, O]

    x2 = x.reshape(B, NM).astype(cdt)

    # ---- generation-aware VMEM budget & batch tile ---------------------------
    if vmem_budget_bytes is None:
        try:
            cap = pltpu.get_tpu_info().vmem_capacity_bytes
        except Exception:
            cap = 64 * 1024 * 1024          # v7x per-core VMEM = smallest in fleet
        vmem_budget_bytes = min(cap // 2, 48 * 1024 * 1024)
    itemsize = jnp.dtype(cdt).itemsize
    TB = _pick_batch_tile(B, NM, O, itemsize, itemsize, batch_tile, vmem_budget_bytes)
    n_tiles = pl.cdiv(B, TB)

    kernel = functools.partial(_ipnn_fused_kernel, batch=B, tile=TB)

    out_raw, stats = pl.pallas_call(
        kernel,
        out_shape=(jax.ShapeDtypeStruct((B, O), f32),
                   jax.ShapeDtypeStruct((n_tiles, 2, O), f32)),
        grid_spec=pl.GridSpec(
            grid=(n_tiles,),
            in_specs=[
                pl.BlockSpec((TB, NM), lambda i: (i, 0)),        # activations: batch-tiled
                pl.BlockSpec((2 * NM, O), lambda i: (0, 0)),     # merged weight: resident
            ],
            out_specs=[
                pl.BlockSpec((TB, O), lambda i: (i, 0)),         # un-normalized output
                pl.BlockSpec((1, 2, O), lambda i: (i, 0, 0)),    # per-tile BN partials
            ],
        ),
        compiler_params=pltpu.CompilerParams(
            dimension_semantics=("parallel",),
            vmem_limit_bytes=int(vmem_budget_bytes)),
    )(x2, w_fold)

    if use_bn:
        # Finish BN on the tiny [n_tiles, 2, O] partials; bias b_aff is omitted
        # because the mean subtraction cancels it exactly.
        col_sum = jnp.sum(stats[:, 0, :], axis=0)
        col_ssq = jnp.sum(stats[:, 1, :], axis=0)
        mean = col_sum / B
        var = jnp.maximum(col_ssq / B - jnp.square(mean), 0.0)
        out = (out_raw - mean) * lax.rsqrt(var + eps)
    else:
        out = out_raw + b_aff.astype(f32)

    # TODO(synk): Dropout with p > 0 (training) not implemented; module default p=0 is identity.
    return out


def _reference_forward(x, W_z, theta, W_aff, b_aff, *, num_fields, embedding_dim,
                       eps=1e-5, use_bn=True):
    """Plain-JAX mirror of the PyTorch forward (training-mode BN, dropout p=0)."""
    B = x.shape[0]
    x3 = x.reshape(B, num_fields, embedding_dim)
    lz = jnp.einsum('bnm,dnm->bd', x3, W_z)
    delta = jnp.einsum('bnm,dn->bdnm', x3, theta)
    lp = jnp.einsum('bdnm,bdnm->bd', delta, delta)
    out = jnp.concatenate([lz, lp], axis=1) @ W_aff.T + b_aff
    if use_bn:
        mean = out.mean(axis=0, keepdims=True)
        var = ((out - mean) ** 2).mean(axis=0, keepdims=True)
        out = (out - mean) / jnp.sqrt(var + eps)
    return out


if __name__ == "__main__":
    # Small, module-consistent shapes.
    N = 4            # num_fields
    M = 8            # embedding_dim
    OUT = 16         # block_out_dim
    D2 = N * (N - 1) // 2
    B = 256          # batch (TB=128 -> grid=(2,), both tiles full)

    key = jax.random.PRNGKey(0)
    k_x, k_wz, k_th, k_wa, k_ba = jax.random.split(key, 5)

    x = jax.random.normal(k_x, (B, N * M), dtype=jnp.float32)
    W_z = jax.random.normal(k_wz, (N, N, M), dtype=jnp.float32)
    theta = jax.random.normal(k_th, (D2, N), dtype=jnp.float32)
    bound = 1.0 / np.sqrt(N + D2)
    W_aff = jax.random.uniform(k_wa, (OUT, N + D2), jnp.float32, -bound, bound)
    b_aff = jax.random.uniform(k_ba, (OUT,), jnp.float32, -bound, bound)

    # f32 path, full tiles
    fwd = jax.jit(functools.partial(inner_product_forward,
                                    num_fields=N, embedding_dim=M))
    out = jax.block_until_ready(fwd(x, W_z, theta, W_aff, b_aff))
    ref = _reference_forward(x, W_z, theta, W_aff, b_aff,
                             num_fields=N, embedding_dim=M)
    np.testing.assert_allclose(np.asarray(out), np.asarray(ref),
                               rtol=2e-4, atol=2e-4)

    # f32 path, ragged batch (B % TB != 0): masked rows must not pollute BN stats
    Br = 200
    fwd_r = jax.jit(functools.partial(inner_product_forward, num_fields=N,
                                      embedding_dim=M, batch_tile=128))
    out_r = jax.block_until_ready(fwd_r(x[:Br], W_z, theta, W_aff, b_aff))
    ref_r = _reference_forward(x[:Br], W_z, theta, W_aff, b_aff,
                               num_fields=N, embedding_dim=M)
    np.testing.assert_allclose(np.asarray(out_r), np.asarray(ref_r),
                               rtol=2e-4, atol=2e-4)

    # bf16 activation/weight path (HBM-traffic win on v6e/v7x), f32 accumulation
    fwd_bf16 = jax.jit(functools.partial(inner_product_forward, num_fields=N,
                                         embedding_dim=M,
                                         compute_dtype=jnp.bfloat16))
    out_bf = jax.block_until_ready(fwd_bf16(x, W_z, theta, W_aff, b_aff))
    np.testing.assert_allclose(np.asarray(out_bf), np.asarray(ref),
                               rtol=5e-2, atol=1.5e-1)

    print("KERNEL_OK")
</pallas_src>

<mosaic_0001>
module attributes {stable_mosaic.version = 11 : i64} {
  func.func @_ipnn_fused_kernel(%arg0: i32, %arg1: memref<128x32xf32, #tpu.memory_space<vmem>>, %arg2: memref<64x16xf32, #tpu.memory_space<vmem>>, %arg3: memref<128x16xf32, #tpu.memory_space<vmem>>, %arg4: memref<1x2x16xf32, #tpu.memory_space<vmem>>) attributes {dimension_semantics = [#tpu.dimension_semantics<parallel>], iteration_bounds = array<i64: 2>, scalar_prefetch = 0 : i64, scratch_operands = 0 : i64, tpu.core_type = #tpu.core_type<tc>, window_params = [{transform_indices = @transform_0, window_bounds = array<i64: 128, 32>}, {pipeline_mode = #tpu.pipeline_mode<synchronous>, transform_indices = @transform_1, window_bounds = array<i64: 64, 16>}, {transform_indices = @transform_2, window_bounds = array<i64: 128, 16>}, {transform_indices = @transform_3, window_bounds = array<i64: 1, 2, 16>}]} {
    %c0 = arith.constant 0 : index
    %c0_0 = arith.constant 0 : index
    %0 = vector.load %arg1[%c0, %c0_0] : memref<128x32xf32, #tpu.memory_space<vmem>>, vector<128x32xf32>
    %1 = arith.mulf %0, %0 : vector<128x32xf32>
    %2 = tpu.concatenate %0, %1 in 1 : vector<128x32xf32>, vector<128x32xf32> -> vector<128x64xf32>
    %c0_1 = arith.constant 0 : index
    %c0_2 = arith.constant 0 : index
    %3 = vector.load %arg2[%c0_1, %c0_2] : memref<64x16xf32, #tpu.memory_space<vmem>>, vector<64x16xf32>
    %cst = arith.constant dense<0.000000e+00> : vector<128x16xf32>
    %4 = tpu.matmul %2, %3, %cst {dimension_numbers = #tpu.dot_dimension_numbers<[1], [0], [0], [1], [0, 0, 1, 1], [], []>} : vector<128x64xf32>, vector<64x16xf32>, vector<128x16xf32> -> vector<128x16xf32>
    %c0_3 = arith.constant 0 : index
    %c0_4 = arith.constant 0 : index
    %5 = vector.load %arg3[%c0_3, %c0_4] : memref<128x16xf32, #tpu.memory_space<vmem>>, vector<128x16xf32>
    tpu.vector_store %arg3[%c0_3, %c0_4], %4 {strides = array<i32>} : memref<128x16xf32, #tpu.memory_space<vmem>>, vector<128x16xf32>,
    %6 = tpu.iota {dimensions = array<i32: 0>} : vector<128x16xi32>
    %c128_i32 = arith.constant 128 : i32
    %7 = arith.muli %arg0, %c128_i32 : i32
    %8 = vector.broadcast %7 : i32 to vector<128x16xi32>
    %9 = arith.addi %6, %8 : vector<128x16xi32>
    %c256_i32 = arith.constant 256 : i32
    %10 = vector.broadcast %c256_i32 : i32 to vector<128x16xi32>
    %11 = arith.cmpi slt, %9, %10 : vector<128x16xi32>
    %cst_5 = arith.constant 0.000000e+00 : f32
    %12 = vector.broadcast %cst_5 : f32 to vector<128x16xf32>
    %13 = arith.select %11, %4, %12 : vector<128x16xi1>, vector<128x16xf32>
    %cst_6 = arith.constant dense<0.000000e+00> : vector<16xf32>
    %14 = vector.multi_reduction <add>, %13, %cst_6 [0] : vector<128x16xf32> to vector<16xf32>
    %15 = vector.shape_cast %14 : vector<16xf32> to vector<1x16xf32>
    %16 = arith.mulf %13, %13 : vector<128x16xf32>
    %cst_7 = arith.constant dense<0.000000e+00> : vector<16xf32>
    %17 = vector.multi_reduction <add>, %16, %cst_7 [0] : vector<128x16xf32> to vector<16xf32>
    %18 = vector.shape_cast %17 : vector<16xf32> to vector<1x16xf32>
    %19 = tpu.concatenate %15, %18 in 0 : vector<1x16xf32>, vector<1x16xf32> -> vector<2x16xf32>
    %20 = vector.shape_cast %19 : vector<2x16xf32> to vector<1x2x16xf32>
    %c0_8 = arith.constant 0 : index
    %c0_9 = arith.constant 0 : index
    %c0_10 = arith.constant 0 : index
    %21 = vector.load %arg4[%c0_8, %c0_9, %c0_10] : memref<1x2x16xf32, #tpu.memory_space<vmem>>, vector<1x2x16xf32>
    tpu.vector_store %arg4[%c0_8, %c0_9, %c0_10], %20 {strides = array<i32>} : memref<1x2x16xf32, #tpu.memory_space<vmem>>, vector<1x2x16xf32>,
    return
  }
  func.func @transform_0(%arg0: i32) -> (i32, i32) {
    %c0_i32 = arith.constant 0 : i32
    %c0_i32_0 = arith.constant 0 : i32
    return %arg0, %c0_i32 : i32, i32
  }
  func.func @transform_1(%arg0: i32) -> (i32, i32) {
    %c0_i32 = arith.constant 0 : i32
    %c0_i32_0 = arith.constant 0 : i32
    %c0_i32_1 = arith.constant 0 : i32
    return %c0_i32, %c0_i32_0 : i32, i32
  }
  func.func @transform_2(%arg0: i32) -> (i32, i32) {
    %c0_i32 = arith.constant 0 : i32
    %c0_i32_0 = arith.constant 0 : i32
    return %arg0, %c0_i32 : i32, i32
  }
  func.func @transform_3(%arg0: i32) -> (i32, i32, i32) {
    %c0_i32 = arith.constant 0 : i32
    %c0_i32_0 = arith.constant 0 : i32
    %c0_i32_1 = arith.constant 0 : i32
    return %arg0, %c0_i32, %c0_i32_0 : i32, i32, i32
  }
}

</mosaic_0001>

<llo_original>
// kernel: inner_product_forward.1
$region0: #{inner_product_forward.1}
  #allocation0 [shape = 'u32[]', space=smem, size = 0x4, offset = 0x4, fixed_abs, tag = 'smem constant byte address 0x4 - core index']
  #allocation1 [shape = 'u32[72,128]{1,0:T(1,128)}', space=vmem, size = 0x9000, scoped, tag = 'internal scratch']
  %s0 = inlined_call_operand.vmem [shape: f32[256,32], index: 0, kind: input, shape index: {}]
  %s1 = inlined_call_operand.vmem [shape: f32[64,16], index: 1, kind: input, shape index: {}]
  %s2 = inlined_call_operand.vmem [shape: f32[256,16], index: 2, kind: output, shape index: {0}]
  %s3 = inlined_call_operand.vmem [shape: f32[2,2,16], index: 3, kind: output, shape index: {1}]
  %4 = xla_tuple %s2, %s3
  %s5 = sld [smem:[#allocation0]]
  $region49: #{inner_product_forward.1} parent=0
    _
  %s7 = ssub.s32 1, %s5
  %s8 = scalar_select 0, %s7, %s5
  loop: start=0, step=1, limit=4
  $region2: #{inner_product_forward.1} parent=0 // loop_pre_header
    _
  $region3: #{inner_product_forward.1} parent=0 // loop_header
    %s10 = sphi 0, %s14
    %p11 = scmp.ge.s32.totalorder %s10, 4
    %s20 = sphi 0, %s22
    %s23 = sphi 0, %s20
    %s24 = sphi 0, %s23
    %s40 = sphi 0, %s24
    %s44 = sphi 0, %s44
    %s46 = sphi 0, %s44
    %s47 = sphi 0, %s46
    %s61 = sphi 0, %s47
    %s67 = sphi 0, %s69
    %s70 = sphi 0, %s67
    %s71 = sphi 0, %s70
    %s87 = sphi 0, %s71
    %s93 = sphi 0, %s95
    %s96 = sphi 0, %s93
    %s97 = sphi 0, %s96
    %s113 = sphi 0, %s97
  $region4: #{inner_product_forward.1} parent=0 // loop_header_branch
    %13 = sbr.rel (%p11) target = $region8
  $region5: #{inner_product_forward.1} parent=0 // loop_body
    %s15 = ssub.s32 %s10, 1
    %s16 = ssub.s32 %s10, 2
    %s17 = sadd.s32 %s10, 1
    %s18 = ssub.s32 %s10, %s17
    %p19 = scmp.eq.s32.totalorder %s18, 0
    %s21 = sadd.s32 %s20, 1
    %s22 = scalar_select %p19, %s20, %s21
    %p25 = pneg %p19
    %p26 = scmp.eq.s32.totalorder %s10, 1
    %p27 = por %p25, %p26
    %p28 = scmp.ne.s32.totalorder %s20, %s23
    %p29 = scmp.eq.s32.totalorder %s10, 0
    %p30 = por %p28, %p29
    %p31 = scmp.ne.s32.totalorder %s20, %s23
    %p32 = scmp.eq.s32.totalorder %s15, 1
    %p33 = por %p31, %p32
    %p34 = scmp.ne.s32.totalorder %s23, %s24
    %p35 = scmp.eq.s32.totalorder %s15, 0
    %p36 = por %p34, %p35
    %p37 = scmp.ne.s32.totalorder %s23, %s24
    %p38 = scmp.eq.s32.totalorder %s16, 1
    %p39 = por %p37, %p38
    %p41 = scmp.ne.s32.totalorder %s24, %s40
    %p42 = scmp.eq.s32.totalorder %s16, 0
    %p43 = por %p41, %p42
    %s45 = sadd.s32 %s44, 1
    %p48 = scmp.eq.s32.totalorder %s10, 1
    %p49 = scmp.ne.s32.totalorder %s44, %s46
    %p50 = scmp.eq.s32.totalorder %s10, 0
    %p51 = por %p49, %p50
    %p52 = scmp.ne.s32.totalorder %s44, %s46
    %p53 = scmp.eq.s32.totalorder %s15, 1
    %p54 = por %p52, %p53
    %p55 = scmp.ne.s32.totalorder %s46, %s47
    %p56 = scmp.eq.s32.totalorder %s15, 0
    %p57 = por %p55, %p56
    %p58 = scmp.ne.s32.totalorder %s46, %s47
    %p59 = scmp.eq.s32.totalorder %s16, 1
    %p60 = por %p58, %p59
    %p62 = scmp.ne.s32.totalorder %s47, %s61
    %p63 = scmp.eq.s32.totalorder %s16, 0
    %p64 = por %p62, %p63
    %s65 = ssub.s32 %s10, %s17
    %p66 = scmp.eq.s32.totalorder %s65, 0
    %s68 = sadd.s32 %s67, 1
    %s69 = scalar_select %p66, %s67, %s68
    %p72 = pneg %p66
    %p73 = scmp.eq.s32.totalorder %s10, 1
    %p74 = por %p72, %p73
    %p75 = scmp.ne.s32.totalorder %s67, %s70
    %p76 = scmp.eq.s32.totalorder %s10, 0
    %p77 = por %p75, %p76
    %p78 = scmp.ne.s32.totalorder %s67, %s70
    %p79 = scmp.eq.s32.totalorder %s15, 1
    %p80 = por %p78, %p79
    %p81 = scmp.ne.s32.totalorder %s70, %s71
    %p82 = scmp.eq.s32.totalorder %s15, 0
    %p83 = por %p81, %p82
    %p84 = scmp.ne.s32.totalorder %s70, %s71
    %p85 = scmp.eq.s32.totalorder %s16, 1
    %p86 = por %p84, %p85
    %p88 = scmp.ne.s32.totalorder %s71, %s87
    %p89 = scmp.eq.s32.totalorder %s16, 0
    %p90 = por %p88, %p89
    %s91 = ssub.s32 %s10, %s17
    %p92 = scmp.eq.s32.totalorder %s91, 0
    %s94 = sadd.s32 %s93, 1
    %s95 = scalar_select %p92, %s93, %s94
    %p98 = pneg %p92
    %p99 = scmp.eq.s32.totalorder %s10, 1
    %p100 = por %p98, %p99
    %p101 = scmp.ne.s32.totalorder %s93, %s96
    %p102 = scmp.eq.s32.totalorder %s10, 0
    %p103 = por %p101, %p102
    %p104 = scmp.ne.s32.totalorder %s93, %s96
    %p105 = scmp.eq.s32.totalorder %s15, 1
    %p106 = por %p104, %p105
    %p107 = scmp.ne.s32.totalorder %s96, %s97
    %p108 = scmp.eq.s32.totalorder %s15, 0
    %p109 = por %p107, %p108
    %p110 = scmp.ne.s32.totalorder %s96, %s97
    %p111 = scmp.eq.s32.totalorder %s16, 1
    %p112 = por %p110, %p111
    %p114 = scmp.ne.s32.totalorder %s97, %s113
    %p115 = scmp.eq.s32.totalorder %s16, 0
    %p116 = por %p114, %p115
    %p117 = scmp.le.s32.totalorder 1, %s10
    %p118 = scmp.lt.s32.totalorder %s10, 3
    %p119 = pnand %p117, %p118
    %p120 = pneg %p119
    // Predicated region
    $region9: #{inner_product_forward.1} parent=5 // pred_check
      _
    $region10: #{inner_product_forward.1} parent=5 // pred_check_branch
      %122 = sbr.rel (%p119) target = $region12
    $region11: #{inner_product_forward.1} parent=5 // pred_region
      %s123 = ssub.s32 %s10, 1
      // Predicated region
      $region13: #{inner_product_forward.1} parent=11 // pred_check
        %p124 = pneg %p57
      $region14: #{inner_product_forward.1} parent=11 // pred_check_branch
        %126 = sbr.rel (%p124) target = $region16
      $region15: #{inner_product_forward.1} parent=11 // pred_region
        _
      $region16: #{inner_product_forward.1} parent=11 // pred_fallthru
        _
    $region12: #{inner_product_forward.1} parent=5 // pred_fallthru
      _
    %p127 = scmp.lt.s32.totalorder %s10, 2
    // Predicated region
    $region17: #{inner_product_forward.1} parent=5 // pred_check
      %p128 = pneg %p127
    $region18: #{inner_product_forward.1} parent=5 // pred_check_branch
      %130 = sbr.rel (%p128) target = $region20
    $region19: #{inner_product_forward.1} parent=5 // pred_region
      // Predicated region
      $region21: #{inner_product_forward.1} parent=19 // pred_check
        %p131 = pneg %p30
      $region22: #{inner_product_forward.1} parent=19 // pred_check_branch
        %133 = sbr.rel (%p131) target = $region24
      $region23: #{inner_product_forward.1} parent=19 // pred_region
        %s134 = smul.u32 16, %s10
        %p135 = scmp.lt.s32.totalorder %s134, 31
        %s136 = scalar_select %p135, %s134, 31
        %s137 = smul.addr %s136, 8
        %s138 = scalar_lea.vmem %s0, %s137
        %s139 = smul.u32 16, %s10
      $region24: #{inner_product_forward.1} parent=19 // pred_fallthru
        _
    $region20: #{inner_product_forward.1} parent=5 // pred_fallthru
      _
    %p140 = scmp.le.s32.totalorder 1, %s10
    %p141 = scmp.lt.s32.totalorder %s10, 3
    %p142 = pnand %p140, %p141
    %p143 = pneg %p142
    // Predicated region
    $region25: #{inner_product_forward.1} parent=5 // pred_check
      _
    $region26: #{inner_product_forward.1} parent=5 // pred_check_branch
      %145 = sbr.rel (%p142) target = $region28
    $region27: #{inner_product_forward.1} parent=5 // pred_region
      %s146 = ssub.s32 %s10, 1
      %s147 = smul.u32 16, %s15
      %p148 = scmp.lt.s32.totalorder %s147, 31
      %s149 = scalar_select %p148, %s147, 31
      %s150 = smul.addr %s149, 8
      %s151 = scalar_lea.vmem %s0, %s150
      %p152 = pneg %p36
      %p153 = pneg %p33
      %p154 = pneg %p57
      %p155 = pneg %p54
      %p156 = pneg %p83
      %p157 = pneg %p80
      %s158 = smul.u32 16, %s15
      %p159 = scmp.lt.s32.totalorder %s158, 31
      %s160 = scalar_select %p159, %s158, 31
      %s161 = smul.addr %s160, 8
      %s162 = scalar_lea.vmem %s2, %s161
      %p163 = pneg %p109
      %p164 = pneg %p106
      %p165 = scmp.lt.s32.totalorder %s15, 1
      %s166 = scalar_select %p165, %s15, 1
      %s167 = smul.addr %s166, 2
      %s168 = scalar_lea.vmem %s3, %s167
      %s169 = smul.u32 16, %s15
      %p170 = scmp.lt.s32.totalorder %s169, 31
      %s171 = scalar_select %p170, %s169, 31
      %s172 = smul.addr %s171, 8
      %s173 = scalar_lea.vmem %s0, %s172
      %s174 = smul.u32 16, %s15
      %s175 = smul.u32 16, %s15
      %p176 = scmp.lt.s32.totalorder %s175, 31
      %s177 = scalar_select %p176, %s175, 31
      %s178 = smul.addr %s177, 8
      %s179 = scalar_lea.vmem %s2, %s178
      %s180 = smul.u32 16, %s15
      %p181 = scmp.lt.s32.totalorder %s15, 1
      %s182 = scalar_select %p181, %s15, 1
      %s183 = smul.addr %s182, 2
      %s184 = scalar_lea.vmem %s3, %s183
      %v185 = vld [vmem:[%s173] sm:$0xff]
      %v186 = vld [vmem:[%s173 + $0x8] sm:$0xff]
      %v187 = vld [vmem:[%s173 + $0x10] sm:$0xff]
      %v188 = vld [vmem:[%s173 + $0x18] sm:$0xff]
      %v189 = vld [vmem:[%s173 + $0x20] sm:$0xff]
      %v190 = vld [vmem:[%s173 + $0x28] sm:$0xff]
      %v191 = vld [vmem:[%s173 + $0x30] sm:$0xff]
      %v192 = vld [vmem:[%s173 + $0x38] sm:$0xff]
      %v193 = vld [vmem:[%s173 + $0x40] sm:$0xff]
      %v194 = vld [vmem:[%s173 + $0x48] sm:$0xff]
      %v195 = vld [vmem:[%s173 + $0x50] sm:$0xff]
      %v196 = vld [vmem:[%s173 + $0x58] sm:$0xff]
      %v197 = vld [vmem:[%s173 + $0x60] sm:$0xff]
      %v198 = vld [vmem:[%s173 + $0x68] sm:$0xff]
      %v199 = vld [vmem:[%s173 + $0x70] sm:$0xff]
      %v200 = vld [vmem:[%s173 + $0x78] sm:$0xff]
      %v201 = vmul.f32 %v185, %v185
      %v202 = vmul.f32 %v186, %v186
      %v203 = vmul.f32 %v187, %v187
      %v204 = vmul.f32 %v188, %v188
      %v205 = vmul.f32 %v189, %v189
      %v206 = vmul.f32 %v190, %v190
      %v207 = vmul.f32 %v191, %v191
      %v208 = vmul.f32 %v192, %v192
      %v209 = vmul.f32 %v193, %v193
      %v210 = vmul.f32 %v194, %v194
      %v211 = vmul.f32 %v195, %v195
      %v212 = vmul.f32 %v196, %v196
      %v213 = vmul.f32 %v197, %v197
      %v214 = vmul.f32 %v198, %v198
      %v215 = vmul.f32 %v199, %v199
      %v216 = vmul.f32 %v200, %v200
      %233 = vrot.lane.b32.xlu0 %v201, 32
      %v234 = vpop.permute.xlu0 %233
      %235 = vrot.lane.b32.xlu0 %v202, 32
      %v236 = vpop.permute.xlu0 %235
      %237 = vrot.lane.b32.xlu0 %v203, 32
      %v238 = vpop.permute.xlu0 %237
      %239 = vrot.lane.b32.xlu0 %v204, 32
      %v240 = vpop.permute.xlu0 %239
      %241 = vrot.lane.b32.xlu0 %v205, 32
      %v242 = vpop.permute.xlu0 %241
      %243 = vrot.lane.b32.xlu0 %v206, 32
      %v244 = vpop.permute.xlu0 %243
      %245 = vrot.lane.b32.xlu0 %v207, 32
      %v246 = vpop.permute.xlu0 %245
      %247 = vrot.lane.b32.xlu0 %v208, 32
      %v248 = vpop.permute.xlu0 %247
      %249 = vrot.lane.b32.xlu0 %v209, 32
      %v250 = vpop.permute.xlu0 %249
      %251 = vrot.lane.b32.xlu0 %v210, 32
      %v252 = vpop.permute.xlu0 %251
      %253 = vrot.lane.b32.xlu0 %v211, 32
      %v254 = vpop.permute.xlu0 %253
      %255 = vrot.lane.b32.xlu0 %v212, 32
      %v256 = vpop.permute.xlu0 %255
      %257 = vrot.lane.b32.xlu0 %v213, 32
      %v258 = vpop.permute.xlu0 %257
      %259 = vrot.lane.b32.xlu0 %v214, 32
      %v260 = vpop.permute.xlu0 %259
      %261 = vrot.lane.b32.xlu0 %v215, 32
      %v262 = vpop.permute.xlu0 %261
      %263 = vrot.lane.b32.xlu0 %v216, 32
      %v264 = vpop.permute.xlu0 %263
      %vm281 = vcmask 261120
      %v282 = vsel %vm281, %v185, %v234
      %v283 = vsel %vm281, %v186, %v236
      %v284 = vsel %vm281, %v187, %v238
      %v285 = vsel %vm281, %v188, %v240
      %v286 = vsel %vm281, %v189, %v242
      %v287 = vsel %vm281, %v190, %v244
      %v288 = vsel %vm281, %v191, %v246
      %v289 = vsel %vm281, %v192, %v248
      %v290 = vsel %vm281, %v193, %v250
      %v291 = vsel %vm281, %v194, %v252
      %v292 = vsel %vm281, %v195, %v254
      %v293 = vsel %vm281, %v196, %v256
      %v294 = vsel %vm281, %v197, %v258
      %v295 = vsel %vm281, %v198, %v260
      %v296 = vsel %vm281, %v199, %v262
      %v297 = vsel %vm281, %v200, %v264
      %v298 = vld [vmem:[%s1] sm:$0xff]
      %v299 = vld [vmem:[%s1 + $0x8] sm:$0xff]
      %v300 = vld [vmem:[%s1 + $0x10] sm:$0xff]
      %v301 = vld [vmem:[%s1 + $0x18] sm:$0xff]
      %v302 = vld [vmem:[%s1 + $0x20] sm:$0xff]
      %v303 = vld [vmem:[%s1 + $0x28] sm:$0xff]
      %v304 = vld [vmem:[%s1 + $0x30] sm:$0xff]
      %v305 = vld [vmem:[%s1 + $0x38] sm:$0xff]
      %vm306 = vcmask 523264
      %v308 = vsel %vm306, %v282, 0
      %v311 = vsel %vm306, %v283, 0
      %v314 = vsel %vm306, %v284, 0
      %v317 = vsel %vm306, %v285, 0
      %v320 = vsel %vm306, %v286, 0
      %v323 = vsel %vm306, %v287, 0
      %v326 = vsel %vm306, %v288, 0
      %v329 = vsel %vm306, %v289, 0
      %v332 = vsel %vm306, %v290, 0
      %v335 = vsel %vm306, %v291, 0
      %v338 = vsel %vm306, %v292, 0
      %v341 = vsel %vm306, %v293, 0
      %v344 = vsel %vm306, %v294, 0
      %v347 = vsel %vm306, %v295, 0
      %v350 = vsel %vm306, %v296, 0
      %v353 = vsel %vm306, %v297, 0
      %355 = vmatpush.msra.mxu0 0.0
      %356 = vmatpush.msra.mxu0 0.0
      %357 = vmatpush.msra.mxu0 0.0
      %358 = vmatpush.msra.mxu0 0.0
      %359 = vmatpush.msra.mxu0 0.0
      %360 = vmatpush.msra.mxu0 0.0
      %361 = vmatpush.msra.mxu0 0.0
      %362 = vmatpush.msra.mxu0 0.0
      %363 = vmatpush.msra.mxu0 %v305
      %364 = vmatpush.msra.mxu0 %v304
      %365 = vmatpush.msra.mxu0 %v303
      %366 = vmatpush.msra.mxu0 %v302
      %367 = vmatpush.msra.mxu0 %v301
      %368 = vmatpush.msra.mxu0 %v300
      %369 = vmatpush.msra.mxu0 %v299
      %370 = vmatpush.msra.mxu0 %v298
      %371 = vmatmul.f32.gmra.mxu0 %v308
      %v372 = vpop.f32.mrf.mxu0
      %v373 = vadd.f32 0.0, %v372
      %374 = vmatmul.f32.gmra.mxu0 %v311
      %v375 = vpop.f32.mrf.mxu0
      %v376 = vadd.f32 0.0, %v375
      %377 = vmatmul.f32.gmra.mxu0 %v314
      %v378 = vpop.f32.mrf.mxu0
      %v379 = vadd.f32 0.0, %v378
      %380 = vmatmul.f32.gmra.mxu0 %v317
      %v381 = vpop.f32.mrf.mxu0
      %v382 = vadd.f32 0.0, %v381
      %383 = vmatmul.f32.gmra.mxu0 %v320
      %v384 = vpop.f32.mrf.mxu0
      %v385 = vadd.f32 0.0, %v384
      %386 = vmatmul.f32.gmra.mxu0 %v323
      %v387 = vpop.f32.mrf.mxu0
      %v388 = vadd.f32 0.0, %v387
      %389 = vmatmul.f32.gmra.mxu0 %v326
      %v390 = vpop.f32.mrf.mxu0
      %v391 = vadd.f32 0.0, %v390
      %392 = vmatmul.f32.gmra.mxu0 %v329
      %v393 = vpop.f32.mrf.mxu0
      %v394 = vadd.f32 0.0, %v393
      %395 = vmatmul.f32.gmra.mxu0 %v332
      %v396 = vpop.f32.mrf.mxu0
      %v397 = vadd.f32 0.0, %v396
      %398 = vmatmul.f32.gmra.mxu0 %v335
      %v399 = vpop.f32.mrf.mxu0
      %v400 = vadd.f32 0.0, %v399
      %401 = vmatmul.f32.gmra.mxu0 %v338
      %v402 = vpop.f32.mrf.mxu0
      %v403 = vadd.f32 0.0, %v402
      %404 = vmatmul.f32.gmra.mxu0 %v341
      %v405 = vpop.f32.mrf.mxu0
      %v406 = vadd.f32 0.0, %v405
      %407 = vmatmul.f32.gmra.mxu0 %v344
      %v408 = vpop.f32.mrf.mxu0
      %v409 = vadd.f32 0.0, %v408
      %410 = vmatmul.f32.gmra.mxu0 %v347
      %v411 = vpop.f32.mrf.mxu0
      %v412 = vadd.f32 0.0, %v411
      %413 = vmatmul.f32.gmra.mxu0 %v350
      %v414 = vpop.f32.mrf.mxu0
      %v415 = vadd.f32 0.0, %v414
      %416 = vmatmul.f32.gmra.mxu0 %v353
      %v417 = vpop.f32.mrf.mxu0
      %v418 = vadd.f32 0.0, %v417
      %419 = vdwg.mxu0
      %vm420 = vcmask 130048
      %421 = vst.msk [vmem:[%s179] sm:$0xff] %vm420, %v373
      %422 = vst.msk [vmem:[%s179 + $0x8] sm:$0xff] %vm420, %v376
      %423 = vst.msk [vmem:[%s179 + $0x10] sm:$0xff] %vm420, %v379
      %424 = vst.msk [vmem:[%s179 + $0x18] sm:$0xff] %vm420, %v382
      %425 = vst.msk [vmem:[%s179 + $0x20] sm:$0xff] %vm420, %v385
      %426 = vst.msk [vmem:[%s179 + $0x28] sm:$0xff] %vm420, %v388
      %427 = vst.msk [vmem:[%s179 + $0x30] sm:$0xff] %vm420, %v391
      %428 = vst.msk [vmem:[%s179 + $0x38] sm:$0xff] %vm420, %v394
      %429 = vst.msk [vmem:[%s179 + $0x40] sm:$0xff] %vm420, %v397
      %430 = vst.msk [vmem:[%s179 + $0x48] sm:$0xff] %vm420, %v400
      %431 = vst.msk [vmem:[%s179 + $0x50] sm:$0xff] %vm420, %v403
      %432 = vst.msk [vmem:[%s179 + $0x58] sm:$0xff] %vm420, %v406
      %433 = vst.msk [vmem:[%s179 + $0x60] sm:$0xff] %vm420, %v409
      %434 = vst.msk [vmem:[%s179 + $0x68] sm:$0xff] %vm420, %v412
      %435 = vst.msk [vmem:[%s179 + $0x70] sm:$0xff] %vm420, %v415
      %436 = vst.msk [vmem:[%s179 + $0x78] sm:$0xff] %vm420, %v418
      %v437 = vlaneseq
      %v438 = vshrl.u32 %v437, 7
      %v439 = vadd.s32 %v438, 8
      %v440 = vadd.s32 %v438, 16
      %v441 = vadd.s32 %v438, 24
      %v442 = vadd.s32 %v438, 32
      %v443 = vadd.s32 %v438, 40
      %v444 = vadd.s32 %v438, 48
      %v445 = vadd.s32 %v438, 56
      %v446 = vadd.s32 %v438, 64
      %v447 = vadd.s32 %v438, 72
      %v448 = vadd.s32 %v438, 80
      %v449 = vadd.s32 %v438, 88
      %v450 = vadd.s32 %v438, 96
      %v451 = vadd.s32 %v438, 104
      %v452 = vadd.s32 %v438, 112
      %v453 = vadd.s32 %v438, 120
      %s454 = smul.u32 %s15, 128
      %v455 = vstv %s454
      %v456 = vadd.s32 %v438, %v455
      %v457 = vadd.s32 %v439, %v455
      %v458 = vadd.s32 %v440, %v455
      %v459 = vadd.s32 %v441, %v455
      %v460 = vadd.s32 %v442, %v455
      %v461 = vadd.s32 %v443, %v455
      %v462 = vadd.s32 %v444, %v455
      %v463 = vadd.s32 %v445, %v455
      %v464 = vadd.s32 %v446, %v455
      %v465 = vadd.s32 %v447, %v455
      %v466 = vadd.s32 %v448, %v455
      %v467 = vadd.s32 %v449, %v455
      %v468 = vadd.s32 %v450, %v455
      %v469 = vadd.s32 %v451, %v455
      %v470 = vadd.s32 %v452, %v455
      %v471 = vadd.s32 %v453, %v455
      %vm472 = vcmp.lt.s32.totalorder %v456, 256
      %vm473 = vcmp.lt.s32.totalorder %v457, 256
      %vm474 = vcmp.lt.s32.totalorder %v458, 256
      %vm475 = vcmp.lt.s32.totalorder %v459, 256
      %vm476 = vcmp.lt.s32.totalorder %v460, 256
      %vm477 = vcmp.lt.s32.totalorder %v461, 256
      %vm478 = vcmp.lt.s32.totalorder %v462, 256
      %vm479 = vcmp.lt.s32.totalorder %v463, 256
      %vm480 = vcmp.lt.s32.totalorder %v464, 256
      %vm481 = vcmp.lt.s32.totalorder %v465, 256
      %vm482 = vcmp.lt.s32.totalorder %v466, 256
      %vm483 = vcmp.lt.s32.totalorder %v467, 256
      %vm484 = vcmp.lt.s32.totalorder %v468, 256
      %vm485 = vcmp.lt.s32.totalorder %v469, 256
      %vm486 = vcmp.lt.s32.totalorder %v470, 256
      %vm487 = vcmp.lt.s32.totalorder %v471, 256
      %v488 = vsel %vm472, %v373, 0.0
      %v489 = vsel %vm473, %v376, 0.0
      %v490 = vsel %vm474, %v379, 0.0
      %v491 = vsel %vm475, %v382, 0.0
      %v492 = vsel %vm476, %v385, 0.0
      %v493 = vsel %vm477, %v388, 0.0
      %v494 = vsel %vm478, %v391, 0.0
      %v495 = vsel %vm479, %v394, 0.0
      %v496 = vsel %vm480, %v397, 0.0
      %v497 = vsel %vm481, %v400, 0.0
      %v498 = vsel %vm482, %v403, 0.0
      %v499 = vsel %vm483, %v406, 0.0
      %v500 = vsel %vm484, %v409, 0.0
      %v501 = vsel %vm485, %v412, 0.0
      %v502 = vsel %vm486, %v415, 0.0
      %v503 = vsel %vm487, %v418, 0.0
      %v504 = vsel %vm420, %v488, 0.0
      %v505 = vsel %vm420, %v489, 0.0
      %v506 = vadd.f32 %v504, %v505
      %v507 = vsel %vm420, %v490, 0.0
      %v508 = vadd.f32 %v506, %v507
      %v509 = vsel %vm420, %v491, 0.0
      %v510 = vadd.f32 %v508, %v509
      %v511 = vsel %vm420, %v492, 0.0
      %v512 = vadd.f32 %v510, %v511
      %v513 = vsel %vm420, %v493, 0.0
      %v514 = vadd.f32 %v512, %v513
      %v515 = vsel %vm420, %v494, 0.0
      %v516 = vadd.f32 %v514, %v515
      %v517 = vsel %vm420, %v495, 0.0
      %v518 = vadd.f32 %v516, %v517
      %v519 = vsel %vm420, %v496, 0.0
      %v520 = vadd.f32 %v518, %v519
      %v521 = vsel %vm420, %v497, 0.0
      %v522 = vadd.f32 %v520, %v521
      %v523 = vsel %vm420, %v498, 0.0
      %v524 = vadd.f32 %v522, %v523
      %v525 = vsel %vm420, %v499, 0.0
      %v526 = vadd.f32 %v524, %v525
      %v527 = vsel %vm420, %v500, 0.0
      %v528 = vadd.f32 %v526, %v527
      %v529 = vsel %vm420, %v501, 0.0
      %v530 = vadd.f32 %v528, %v529
      %v531 = vsel %vm420, %v502, 0.0
      %v532 = vadd.f32 %v530, %v531
      %v533 = vsel %vm420, %v503, 0.0
      %v534 = vadd.f32 %v532, %v533
      %v535 = vrot.slane %v534, 4
      %v536 = vadd.f32 %v534, %v535
      %v537 = vrot.slane %v536, 2
      %v538 = vadd.f32 %v536, %v537
      %v539 = vrot.slane %v538, 1
      %v540 = vadd.f32 %v538, %v539
      %v541 = vmul.f32 %v488, %v488
      %v542 = vmul.f32 %v489, %v489
      %v543 = vmul.f32 %v490, %v490
      %v544 = vmul.f32 %v491, %v491
      %v545 = vmul.f32 %v492, %v492
      %v546 = vmul.f32 %v493, %v493
      %v547 = vmul.f32 %v494, %v494
      %v548 = vmul.f32 %v495, %v495
      %v549 = vmul.f32 %v496, %v496
      %v550 = vmul.f32 %v497, %v497
      %v551 = vmul.f32 %v498, %v498
      %v552 = vmul.f32 %v499, %v499
      %v553 = vmul.f32 %v500, %v500
      %v554 = vmul.f32 %v501, %v501
      %v555 = vmul.f32 %v502, %v502
      %v556 = vmul.f32 %v503, %v503
      %v557 = vsel %vm420, %v541, 0.0
      %v558 = vsel %vm420, %v542, 0.0
      %v559 = vadd.f32 %v557, %v558
      %v560 = vsel %vm420, %v543, 0.0
      %v561 = vadd.f32 %v559, %v560
      %v562 = vsel %vm420, %v544, 0.0
      %v563 = vadd.f32 %v561, %v562
      %v564 = vsel %vm420, %v545, 0.0
      %v565 = vadd.f32 %v563, %v564
      %v566 = vsel %vm420, %v546, 0.0
      %v567 = vadd.f32 %v565, %v566
      %v568 = vsel %vm420, %v547, 0.0
      %v569 = vadd.f32 %v567, %v568
      %v570 = vsel %vm420, %v548, 0.0
      %v571 = vadd.f32 %v569, %v570
      %v572 = vsel %vm420, %v549, 0.0
      %v573 = vadd.f32 %v571, %v572
      %v574 = vsel %vm420, %v550, 0.0
      %v575 = vadd.f32 %v573, %v574
      %v576 = vsel %vm420, %v551, 0.0
      %v577 = vadd.f32 %v575, %v576
      %v578 = vsel %vm420, %v552, 0.0
      %v579 = vadd.f32 %v577, %v578
      %v580 = vsel %vm420, %v553, 0.0
      %v581 = vadd.f32 %v579, %v580
      %v582 = vsel %vm420, %v554, 0.0
      %v583 = vadd.f32 %v581, %v582
      %v584 = vsel %vm420, %v555, 0.0
      %v585 = vadd.f32 %v583, %v584
      %v586 = vsel %vm420, %v556, 0.0
      %v587 = vadd.f32 %v585, %v586
      %v588 = vrot.slane %v587, 4
      %v589 = vadd.f32 %v587, %v588
      %v590 = vrot.slane %v589, 2
      %v591 = vadd.f32 %v589, %v590
      %v592 = vrot.slane %v591, 1
      %v593 = vadd.f32 %v591, %v592
      %vm594 = vcmask 1040384
      %v595 = vsel %vm594, %v540, %v593
      %vm596 = vcmask 123904
      %597 = vst.msk [vmem:[%s184] sm:$0x3] %vm596, %v595
      %s598 = smul.u32 16, %s15
      %p599 = scmp.lt.s32.totalorder %s598, 31
      %s600 = scalar_select %p599, %s598, 31
      %s601 = smul.addr %s600, 8
      %s602 = scalar_lea.vmem %s2, %s601
      %p603 = scmp.lt.s32.totalorder %s15, 1
      %s604 = scalar_select %p603, %s15, 1
      %s605 = smul.addr %s604, 2
      %s606 = scalar_lea.vmem %s3, %s605
      // Predicated region
      $region29: #{inner_product_forward.1} parent=27 // pred_check
        %p607 = pneg %p80
      $region30: #{inner_product_forward.1} parent=27 // pred_check_branch
        %609 = sbr.rel (%p607) target = $region32
      $region31: #{inner_product_forward.1} parent=27 // pred_region
        %s610 = smul.u32 16, %s15
      $region32: #{inner_product_forward.1} parent=27 // pred_fallthru
        _
      // Predicated region
      $region33: #{inner_product_forward.1} parent=27 // pred_check
        %p611 = pneg %p106
      $region34: #{inner_product_forward.1} parent=27 // pred_check_branch
        %613 = sbr.rel (%p611) target = $region36
      $region35: #{inner_product_forward.1} parent=27 // pred_region
        _
      $region36: #{inner_product_forward.1} parent=27 // pred_fallthru
        _
    $region28: #{inner_product_forward.1} parent=5 // pred_fallthru
      _
    %p614 = scmp.le.s32.totalorder 2, %s10
    // Predicated region
    $region37: #{inner_product_forward.1} parent=5 // pred_check
      %p615 = pneg %p614
    $region38: #{inner_product_forward.1} parent=5 // pred_check_branch
      %617 = sbr.rel (%p615) target = $region40
    $region39: #{inner_product_forward.1} parent=5 // pred_region
      %s618 = ssub.s32 %s10, 2
      // Predicated region
      $region41: #{inner_product_forward.1} parent=39 // pred_check
        %p619 = pneg %p86
      $region42: #{inner_product_forward.1} parent=39 // pred_check_branch
        %621 = sbr.rel (%p619) target = $region44
      $region43: #{inner_product_forward.1} parent=39 // pred_region
        %s622 = smul.u32 16, %s16
        %p623 = scmp.lt.s32.totalorder %s622, 31
        %s624 = scalar_select %p623, %s622, 31
        %s625 = smul.addr %s624, 8
        %s626 = scalar_lea.vmem %s2, %s625
      $region44: #{inner_product_forward.1} parent=39 // pred_fallthru
        _
      // Predicated region
      $region45: #{inner_product_forward.1} parent=39 // pred_check
        %p627 = pneg %p112
      $region46: #{inner_product_forward.1} parent=39 // pred_check_branch
        %629 = sbr.rel (%p627) target = $region48
      $region47: #{inner_product_forward.1} parent=39 // pred_region
        %p630 = scmp.lt.s32.totalorder %s16, 1
        %s631 = scalar_select %p630, %s16, 1
        %s632 = smul.addr %s631, 2
        %s633 = scalar_lea.vmem %s3, %s632
      $region48: #{inner_product_forward.1} parent=39 // pred_fallthru
        _
    $region40: #{inner_product_forward.1} parent=5 // pred_fallthru
      _
  $region6: #{inner_product_forward.1} parent=0 // loop_footer
    %s14 = sadd.s32 1, %s10
  $region7: #{inner_product_forward.1} parent=0 // loop_footer_branch
    %9 = sbr.rel target = $region3
  $region8: #{inner_product_forward.1} parent=0 // loop_exit
    _

</llo_original>
